<compile_context>
chip_gen: v6e
topology: v6e:2x2x1
jax: 0.10.0
libtpu: 0.0.40
codegen_flags: <defaults>
</compile_context>

<pallas_src>
import functools

import jax
import jax.numpy as jnp
from jax.experimental import pallas as pl
from jax.experimental.pallas import tpu as pltpu

BN_EPS = 1e-5


def _rup8(n):
    return ((n + 7) // 8) * 8


def _hardswish(v):
    return v * jnp.clip(v + 3.0, 0.0, 6.0) * (1.0 / 6.0)


def inverted_residual_kernel(
    x_ref,       # (Cin, HW)   one image: channels on sublanes, H*W on lanes
    mats_ref,    # (Rm, Cm)    sublane-stacked small matrices (wcat/wc1t/wc2t/ws/w2t)
    cols_ref,    # (Rc, 1)     sublane-stacked bias + depthwise-tap columns
    out_ref,     # (Cout, HW)
    *, H, W, Cin, Mid, Mr, Cout, m_off, c_off, tap_stride,
):
    HW = H * W
    x = x_ref[...]                                                     # (Cin, HW)

    # --- static, 8-aligned sub-views of the two packed parameter slabs ---
    wcat  = mats_ref[pl.ds(m_off["wcat"], Mid + Cout), pl.ds(0, Cin)]  # (Mid+Cout, Cin)
    wc1t  = mats_ref[pl.ds(m_off["wc1t"], Mr),         pl.ds(0, Mid)]  # (Mr, Mid)
    wc2t  = mats_ref[pl.ds(m_off["wc2t"], Mid),        pl.ds(0, Mr)]   # (Mid, Mr)
    wsrow = mats_ref[pl.ds(m_off["ws"], 1),            pl.ds(0, Mid)]  # (1, Mid)
    w2t   = mats_ref[pl.ds(m_off["w2t"], Cout),        pl.ds(0, Mid)]  # (Cout, Mid)

    bcat = cols_ref[pl.ds(c_off["bcat"], Mid + Cout), :]               # (Mid+Cout, 1)
    bdw  = cols_ref[pl.ds(c_off["bdw"], Mid), :]                       # (Mid, 1)
    bc1  = cols_ref[pl.ds(c_off["bc1"], Mr), :]                        # (Mr, 1)
    bc2  = cols_ref[pl.ds(c_off["bc2"], Mid), :]                       # (Mid, 1)
    b2   = cols_ref[pl.ds(c_off["b2"], Cout), :]                       # (Cout, 1)
    bs   = cols_ref[pl.ds(c_off["bs"], 1), :]                          # (1, 1)

    # --- fused pointwise expand + skip 1x1 convs: one MXU pass over x ---
    ycat = jnp.dot(wcat, x, preferred_element_type=jnp.float32) + bcat  # (Mid+Cout, HW)
    y1 = _hardswish(ycat[:Mid])                                         # (Mid, HW)
    skip = ycat[Mid:Mid + Cout]                                         # (Cout, HW)

    # --- depthwise 3x3, stride 1, pad 1 (BN folded) + Hardswish ---
    # Shifted views via XLU lane rolls; zero padding via hoisted boundary masks.
    lane = jax.lax.broadcasted_iota(jnp.int32, (Mid, HW), 1)
    if (W & (W - 1)) == 0:                       # H, W powers of two -> bit ops
        w_pos = lane & (W - 1)
        h_pos = lane >> (W.bit_length() - 1)
    else:
        w_pos = lane % W
        h_pos = lane // W
    row_masks = (h_pos >= 1, None, h_pos <= H - 2)
    col_masks = (w_pos >= 1, None, w_pos <= W - 2)

    acc = jnp.zeros((Mid, HW), jnp.float32)
    for dy in range(3):
        for dx in range(3):
            shift = ((1 - dy) * W + (1 - dx)) % HW
            src = pltpu.roll(y1, shift, axis=1) if shift else y1
            rm, cm = row_masks[dy], col_masks[dx]
            m = rm if cm is None else (cm if rm is None else rm & cm)
            if m is not None:
                src = jnp.where(m, src, 0.0)
            tap = cols_ref[pl.ds(c_off["wdw"] + (dy * 3 + dx) * tap_stride, Mid), :]
            acc = acc + src * tap
    y2 = _hardswish(acc + bdw)                                           # (Mid, HW)

    # --- scSE (channel SE over this image + spatial SE) ---
    pooled = jnp.sum(y2, axis=1, keepdims=True) * (1.0 / HW)             # (Mid, 1)
    hid = jnp.maximum(
        jnp.dot(wc1t, pooled, preferred_element_type=jnp.float32) + bc1, 0.0)   # (Mr, 1)
    cse = jax.nn.sigmoid(
        jnp.dot(wc2t, hid, preferred_element_type=jnp.float32) + bc2)           # (Mid, 1)
    sse = jax.nn.sigmoid(
        jnp.dot(wsrow, y2, preferred_element_type=jnp.float32) + bs)            # (1, HW)
    y3 = y2 * (cse + sse)                                                        # (Mid, HW)

    # --- pointwise project (BN folded) + residual add; lane-dense store ---
    out_ref[...] = skip + jnp.dot(w2t, y3, preferred_element_type=jnp.float32) + b2


def pack_params(params):
    """One-time parameter prep: fuse/relayout all weights into two VMEM slabs."""
    f32 = jnp.float32
    Cin, Mid = params["w1"].shape
    Mr = params["wc1"].shape[1]
    Cout = params["w2"].shape[1]

    # Matrix slab: sublane-stacked, each piece 8-row aligned, common lane width.
    mat_cols = max(Cin, Mid, Mr)
    pieces = [
        ("wcat", jnp.concatenate([params["w1"], params["wsk"]], axis=1).T),  # (Mid+Cout, Cin)
        ("wc1t", params["wc1"].T),                                           # (Mr, Mid)
        ("wc2t", params["wc2"].T),                                           # (Mid, Mr)
        ("ws",   params["ws"].reshape(1, Mid)),                              # (1, Mid)
        ("w2t",  params["w2"].T),                                            # (Cout, Mid)
    ]
    m_off, rows, r = {}, [], 0
    for name, arr in pieces:
        arr = arr.astype(f32)
        m_off[name] = r
        rows.append(jnp.pad(arr, ((0, _rup8(arr.shape[0]) - arr.shape[0]),
                                  (0, mat_cols - arr.shape[1]))))
        r += _rup8(arr.shape[0])
    mats = jnp.concatenate(rows, axis=0)

    # Column slab: sublane-stacked (., 1) biases + depthwise taps, each 8-aligned.
    c_off, cols, c = {}, [], 0

    def add(name, vec):
        nonlocal c
        vec = jnp.asarray(vec, f32).reshape(-1, 1)
        c_off[name] = c
        cols.append(jnp.pad(vec, ((0, _rup8(vec.shape[0]) - vec.shape[0]), (0, 0))))
        c += _rup8(vec.shape[0])

    add("bcat", jnp.concatenate([params["b1"], params["bsk"]]))
    tap_stride = _rup8(Mid)
    c_off["wdw"] = c
    for k in range(9):
        add(f"_tap{k}", params["wdw"][k])          # each tap at its own 8-aligned block
    add("bdw", params["bdw"])
    add("bc1", params["bc1"])
    add("bc2", params["bc2"])
    add("b2", params["b2"])
    add("bs", params["bs"])
    cols_slab = jnp.concatenate(cols, axis=0)

    meta = dict(Cin=Cin, Mid=Mid, Mr=Mr, Cout=Cout,
                m_off=m_off, c_off=c_off, tap_stride=tap_stride)
    return dict(mats=mats, cols=cols_slab, meta=meta)


def inverted_residual(x_nchw, packed):
    meta = packed["meta"]
    Cin, Mid, Mr, Cout = meta["Cin"], meta["Mid"], meta["Mr"], meta["Cout"]
    N, cin_x, H, W = x_nchw.shape
    assert cin_x == Cin
    HW = H * W

    # Free layout change (no transpose): NCHW -> (N, Cin, H*W).
    x_flat = x_nchw.reshape(N, Cin, HW).astype(jnp.float32)

    kernel = functools.partial(
        inverted_residual_kernel, H=H, W=W, Cin=Cin, Mid=Mid, Mr=Mr, Cout=Cout,
        m_off=meta["m_off"], c_off=meta["c_off"], tap_stride=meta["tap_stride"])

    matmul_flops = 2 * HW * ((Mid + Cout) * Cin + Cout * Mid + Mid) + 4 * Mid * Mr
    flops = N * (matmul_flops + 18 * Mid * HW + 12 * Mid * HW)
    cost = pl.CostEstimate(
        flops=int(flops),
        transcendentals=int(N * (HW + Mid)),
        bytes_accessed=int(4 * (x_flat.size + N * Cout * HW
                                + packed["mats"].size + packed["cols"].size)),
    )

    out = pl.pallas_call(
        kernel,
        out_shape=jax.ShapeDtypeStruct((N, Cout, HW), jnp.float32),
        grid=(N,),
        in_specs=[
            pl.BlockSpec((None, Cin, HW), lambda n: (n, 0, 0)),        # per-image slab
            pl.BlockSpec(packed["mats"].shape, lambda n: (0, 0)),      # resident weights
            pl.BlockSpec(packed["cols"].shape, lambda n: (0, 0)),      # resident biases/taps
        ],
        out_specs=pl.BlockSpec((None, Cout, HW), lambda n: (n, 0, 0)),
        compiler_params=pltpu.CompilerParams(
            dimension_semantics=("parallel",)),                        # v7x: 2 TCs share batch
        cost_estimate=cost,
    )(x_flat, packed["mats"], packed["cols"])

    return out.reshape(N, Cout, H, W)


def make_params(key, Cin, Cout, Mid, Mr):
    ks = iter(jax.random.split(key, 40))

    def nrm(shape, scale=0.2):
        return (scale * jax.random.normal(next(ks), shape)).astype(jnp.float32)

    def bn_params(c):
        gamma = 1.0 + nrm((c,), 0.1)
        beta = nrm((c,), 0.1)
        mean = nrm((c,), 0.1)
        var = 1.0 + jnp.abs(nrm((c,), 0.1))
        return gamma, beta, mean, var

    def fold(w, b, bn):
        gamma, beta, mean, var = bn
        s = gamma / jnp.sqrt(var + BN_EPS)
        return w * s[None, :], b * s + (beta - mean * s)

    # raw conv params (PyTorch (out,in,kh,kw) stored transposed: (in,out) / (kh*kw, C))
    w1, b1 = nrm((Cin, Mid)), nrm((Mid,))
    wdw, bdw = nrm((9, Mid)), nrm((Mid,))
    wc1, bc1 = nrm((Mid, Mr)), nrm((Mr,))
    wc2, bc2 = nrm((Mr, Mid)), nrm((Mid,))
    ws, bs = nrm((Mid,)), nrm((1,))
    w2, b2 = nrm((Mid, Cout)), nrm((Cout,))
    wsk, bsk = nrm((Cin, Cout)), nrm((Cout,))

    # fold inference-mode BatchNorm into the preceding conv (exact)
    w1, b1 = fold(w1, b1, bn_params(Mid))
    wdw, bdw = fold(wdw, bdw, bn_params(Mid))
    w2, b2 = fold(w2, b2, bn_params(Cout))
    wsk, bsk = fold(wsk, bsk, bn_params(Cout))

    return dict(w1=w1, b1=b1, wdw=wdw, bdw=bdw, wc1=wc1, bc1=bc1,
                wc2=wc2, bc2=bc2, ws=ws, bs=bs, w2=w2, b2=b2,
                wsk=wsk, bsk=bsk)


def reference(x_nchw, p):
    x = jnp.transpose(x_nchw, (0, 2, 3, 1))
    N, H, W, Cin = x.shape
    y = _hardswish(jnp.einsum("nhwc,cm->nhwm", x, p["w1"]) + p["b1"])
    yp = jnp.pad(y, ((0, 0), (1, 1), (1, 1), (0, 0)))
    acc = jnp.zeros_like(y)
    for dy in range(3):
        for dx in range(3):
            acc = acc + yp[:, dy:dy + H, dx:dx + W, :] * p["wdw"][dy * 3 + dx]
    y2 = _hardswish(acc + p["bdw"])
    pooled = y2.mean(axis=(1, 2))
    hid = jnp.maximum(pooled @ p["wc1"] + p["bc1"], 0.0)
    cse = jax.nn.sigmoid(hid @ p["wc2"] + p["bc2"])[:, None, None, :]
    sse = jax.nn.sigmoid(jnp.einsum("nhwm,m->nhw", y2, p["ws"]) + p["bs"][0])[..., None]
    y3 = y2 * cse + y2 * sse
    res = jnp.einsum("nhwm,mo->nhwo", y3, p["w2"]) + p["b2"]
    skip = jnp.einsum("nhwc,co->nhwo", x, p["wsk"]) + p["bsk"]
    return jnp.transpose(skip + res, (0, 3, 1, 2))


if __name__ == "__main__":
    # InvertedResidual(in_channels=4, out_channels=8, kernel_size=3, stride=1,
    #                  expansion_ratio=2, squeeze_ratio=1)
    N, Cin, Cout, H, W = 2, 4, 8, 16, 16
    expansion_ratio, squeeze_ratio = 2, 1
    Mid = expansion_ratio * Cin
    Mr = max(Mid // squeeze_ratio, 1)

    key = jax.random.PRNGKey(0)
    kx, kp = jax.random.split(key)
    x = jax.random.normal(kx, (N, Cin, H, W), dtype=jnp.float32)
    params = make_params(kp, Cin, Cout, Mid, Mr)

    packed = pack_params(params)            # one-time parameter prep (not per call)
    out = jax.block_until_ready(inverted_residual(x, packed))
    ref = reference(x, params)

    assert out.shape == (N, Cout, H, W)
    if not jnp.allclose(out, ref, atol=2e-3, rtol=2e-3):
        raise AssertionError(
            f"mismatch vs reference, max abs err = {jnp.max(jnp.abs(out - ref))}")
    print("KERNEL_OK")
</pallas_src>

<mosaic_0001>
module attributes {stable_mosaic.version = 11 : i64} {
  func.func @inverted_residual_kernel(%arg0: i32, %arg1: memref<1x4x256xf32, #tpu.memory_space<vmem>>, %arg2: memref<48x8xf32, #tpu.memory_space<vmem>>, %arg3: memref<128x1xf32, #tpu.memory_space<vmem>>, %arg4: memref<1x8x256xf32, #tpu.memory_space<vmem>>) attributes {dimension_semantics = [#tpu.dimension_semantics<parallel>], iteration_bounds = array<i64: 2>, scalar_prefetch = 0 : i64, scratch_operands = 0 : i64, tpu.core_type = #tpu.core_type<tc>, window_params = [{transform_indices = @transform_0, window_bounds = array<i64: 1, 4, 256>}, {pipeline_mode = #tpu.pipeline_mode<synchronous>, transform_indices = @transform_1, window_bounds = array<i64: 48, 8>}, {pipeline_mode = #tpu.pipeline_mode<synchronous>, transform_indices = @transform_2, window_bounds = array<i64: 128, 1>}, {transform_indices = @transform_3, window_bounds = array<i64: 1, 8, 256>}]} {
    %c0 = arith.constant 0 : index
    %c0_0 = arith.constant 0 : index
    %c0_1 = arith.constant 0 : index
    %0 = vector.load %arg1[%c0, %c0_0, %c0_1] : memref<1x4x256xf32, #tpu.memory_space<vmem>>, vector<1x4x256xf32>
    %1 = vector.shape_cast %0 : vector<1x4x256xf32> to vector<4x256xf32>
    %c0_2 = arith.constant 0 : index
    %c0_3 = arith.constant 0 : index
    %2 = vector.load %arg2[%c0_2, %c0_3] : memref<48x8xf32, #tpu.memory_space<vmem>>, vector<16x4xf32>
    %c16 = arith.constant 16 : index
    %c0_4 = arith.constant 0 : index
    %3 = vector.load %arg2[%c16, %c0_4] : memref<48x8xf32, #tpu.memory_space<vmem>>, vector<8x8xf32>
    %c24 = arith.constant 24 : index
    %c0_5 = arith.constant 0 : index
    %4 = vector.load %arg2[%c24, %c0_5] : memref<48x8xf32, #tpu.memory_space<vmem>>, vector<8x8xf32>
    %c32 = arith.constant 32 : index
    %c0_6 = arith.constant 0 : index
    %5 = vector.load %arg2[%c32, %c0_6] : memref<48x8xf32, #tpu.memory_space<vmem>>, vector<1x8xf32>
    %c40 = arith.constant 40 : index
    %c0_7 = arith.constant 0 : index
    %6 = vector.load %arg2[%c40, %c0_7] : memref<48x8xf32, #tpu.memory_space<vmem>>, vector<8x8xf32>
    %c0_8 = arith.constant 0 : index
    %c0_9 = arith.constant 0 : index
    %7 = vector.load %arg3[%c0_8, %c0_9] : memref<128x1xf32, #tpu.memory_space<vmem>>, vector<16x1xf32>
    %c88 = arith.constant 88 : index
    %c0_10 = arith.constant 0 : index
    %8 = vector.load %arg3[%c88, %c0_10] : memref<128x1xf32, #tpu.memory_space<vmem>>, vector<8x1xf32>
    %c96 = arith.constant 96 : index
    %c0_11 = arith.constant 0 : index
    %9 = vector.load %arg3[%c96, %c0_11] : memref<128x1xf32, #tpu.memory_space<vmem>>, vector<8x1xf32>
    %c104 = arith.constant 104 : index
    %c0_12 = arith.constant 0 : index
    %10 = vector.load %arg3[%c104, %c0_12] : memref<128x1xf32, #tpu.memory_space<vmem>>, vector<8x1xf32>
    %c112 = arith.constant 112 : index
    %c0_13 = arith.constant 0 : index
    %11 = vector.load %arg3[%c112, %c0_13] : memref<128x1xf32, #tpu.memory_space<vmem>>, vector<8x1xf32>
    %c120 = arith.constant 120 : index
    %c0_14 = arith.constant 0 : index
    %12 = vector.load %arg3[%c120, %c0_14] : memref<128x1xf32, #tpu.memory_space<vmem>>, vector<1x1xf32>
    %cst = arith.constant dense<0.000000e+00> : vector<16x256xf32>
    %13 = tpu.matmul %2, %1, %cst {dimension_numbers = #tpu.dot_dimension_numbers<[1], [0], [0], [1], [0, 0, 1, 1], [], []>} : vector<16x4xf32>, vector<4x256xf32>, vector<16x256xf32> -> vector<16x256xf32>
    %14 = vector.broadcast %7 : vector<16x1xf32> to vector<16x256xf32>
    %15 = arith.addf %13, %14 : vector<16x256xf32>
    %16 = vector.extract_strided_slice %15 {offsets = [0, 0], sizes = [8, 256], strides = [1, 1]} : vector<16x256xf32> to vector<8x256xf32>
    %cst_15 = arith.constant 3.000000e+00 : f32
    %17 = vector.broadcast %cst_15 : f32 to vector<8x256xf32>
    %18 = arith.addf %16, %17 : vector<8x256xf32>
    %cst_16 = arith.constant 0.000000e+00 : f32
    %cst_17 = arith.constant 6.000000e+00 : f32
    %19 = vector.broadcast %cst_16 : f32 to vector<8x256xf32>
    %20 = arith.maximumf %19, %18 : vector<8x256xf32>
    %21 = vector.broadcast %cst_17 : f32 to vector<8x256xf32>
    %22 = arith.minimumf %21, %20 : vector<8x256xf32>
    %23 = arith.mulf %16, %22 : vector<8x256xf32>
    %cst_18 = arith.constant 0.166666672 : f32
    %24 = vector.broadcast %cst_18 : f32 to vector<8x256xf32>
    %25 = arith.mulf %23, %24 : vector<8x256xf32>
    %26 = vector.extract_strided_slice %15 {offsets = [8, 0], sizes = [8, 256], strides = [1, 1]} : vector<16x256xf32> to vector<8x256xf32>
    %27 = tpu.iota {dimensions = array<i32: 1>} : vector<8x256xi32>
    %c15_i32 = arith.constant 15 : i32
    %28 = vector.broadcast %c15_i32 : i32 to vector<8x256xi32>
    %29 = arith.andi %27, %28 : vector<8x256xi32>
    %c4_i32 = arith.constant 4 : i32
    %30 = vector.broadcast %c4_i32 : i32 to vector<8x256xi32>
    %31 = arith.shrsi %27, %30 : vector<8x256xi32>
    %c1_i32 = arith.constant 1 : i32
    %32 = vector.broadcast %c1_i32 : i32 to vector<8x256xi32>
    %33 = arith.cmpi sge, %31, %32 : vector<8x256xi32>
    %c14_i32 = arith.constant 14 : i32
    %34 = vector.broadcast %c14_i32 : i32 to vector<8x256xi32>
    %35 = arith.cmpi sle, %31, %34 : vector<8x256xi32>
    %c1_i32_19 = arith.constant 1 : i32
    %36 = vector.broadcast %c1_i32_19 : i32 to vector<8x256xi32>
    %37 = arith.cmpi sge, %29, %36 : vector<8x256xi32>
    %c14_i32_20 = arith.constant 14 : i32
    %38 = vector.broadcast %c14_i32_20 : i32 to vector<8x256xi32>
    %39 = arith.cmpi sle, %29, %38 : vector<8x256xi32>
    %cst_21 = arith.constant 0.000000e+00 : f32
    %40 = vector.broadcast %cst_21 : f32 to vector<8x256xf32>
    %c17_i32 = arith.constant 17 : i32
    %41 = tpu.dynamic_rotate %25 by %c17_i32 dim 1 : vector<8x256xf32>, i32 -> vector<8x256xf32>
    %42 = arith.andi %33, %37 : vector<8x256xi1>
    %cst_22 = arith.constant 0.000000e+00 : f32
    %43 = vector.broadcast %cst_22 : f32 to vector<8x256xf32>
    %44 = arith.select %42, %41, %43 : vector<8x256xi1>, vector<8x256xf32>
    %c16_23 = arith.constant 16 : index
    %c0_24 = arith.constant 0 : index
    %45 = vector.load %arg3[%c16_23, %c0_24] : memref<128x1xf32, #tpu.memory_space<vmem>>, vector<8x1xf32>
    %46 = vector.broadcast %45 : vector<8x1xf32> to vector<8x256xf32>
    %47 = arith.mulf %44, %46 : vector<8x256xf32>
    %48 = arith.addf %40, %47 : vector<8x256xf32>
    %c16_i32 = arith.constant 16 : i32
    %49 = tpu.dynamic_rotate %25 by %c16_i32 dim 1 : vector<8x256xf32>, i32 -> vector<8x256xf32>
    %cst_25 = arith.constant 0.000000e+00 : f32
    %50 = vector.broadcast %cst_25 : f32 to vector<8x256xf32>
    %51 = arith.select %33, %49, %50 : vector<8x256xi1>, vector<8x256xf32>
    %c24_26 = arith.constant 24 : index
    %c0_27 = arith.constant 0 : index
    %52 = vector.load %arg3[%c24_26, %c0_27] : memref<128x1xf32, #tpu.memory_space<vmem>>, vector<8x1xf32>
    %53 = vector.broadcast %52 : vector<8x1xf32> to vector<8x256xf32>
    %54 = arith.mulf %51, %53 : vector<8x256xf32>
    %55 = arith.addf %48, %54 : vector<8x256xf32>
    %c15_i32_28 = arith.constant 15 : i32
    %56 = tpu.dynamic_rotate %25 by %c15_i32_28 dim 1 : vector<8x256xf32>, i32 -> vector<8x256xf32>
    %57 = arith.andi %33, %39 : vector<8x256xi1>
    %cst_29 = arith.constant 0.000000e+00 : f32
    %58 = vector.broadcast %cst_29 : f32 to vector<8x256xf32>
    %59 = arith.select %57, %56, %58 : vector<8x256xi1>, vector<8x256xf32>
    %c32_30 = arith.constant 32 : index
    %c0_31 = arith.constant 0 : index
    %60 = vector.load %arg3[%c32_30, %c0_31] : memref<128x1xf32, #tpu.memory_space<vmem>>, vector<8x1xf32>
    %61 = vector.broadcast %60 : vector<8x1xf32> to vector<8x256xf32>
    %62 = arith.mulf %59, %61 : vector<8x256xf32>
    %63 = arith.addf %55, %62 : vector<8x256xf32>
    %c1_i32_32 = arith.constant 1 : i32
    %64 = tpu.dynamic_rotate %25 by %c1_i32_32 dim 1 : vector<8x256xf32>, i32 -> vector<8x256xf32>
    %cst_33 = arith.constant 0.000000e+00 : f32
    %65 = vector.broadcast %cst_33 : f32 to vector<8x256xf32>
    %66 = arith.select %37, %64, %65 : vector<8x256xi1>, vector<8x256xf32>
    %c40_34 = arith.constant 40 : index
    %c0_35 = arith.constant 0 : index
    %67 = vector.load %arg3[%c40_34, %c0_35] : memref<128x1xf32, #tpu.memory_space<vmem>>, vector<8x1xf32>
    %68 = vector.broadcast %67 : vector<8x1xf32> to vector<8x256xf32>
    %69 = arith.mulf %66, %68 : vector<8x256xf32>
    %70 = arith.addf %63, %69 : vector<8x256xf32>
    %c48 = arith.constant 48 : index
    %c0_36 = arith.constant 0 : index
    %71 = vector.load %arg3[%c48, %c0_36] : memref<128x1xf32, #tpu.memory_space<vmem>>, vector<8x1xf32>
    %72 = vector.broadcast %71 : vector<8x1xf32> to vector<8x256xf32>
    %73 = arith.mulf %25, %72 : vector<8x256xf32>
    %74 = arith.addf %70, %73 : vector<8x256xf32>
    %c255_i32 = arith.constant 255 : i32
    %75 = tpu.dynamic_rotate %25 by %c255_i32 dim 1 : vector<8x256xf32>, i32 -> vector<8x256xf32>
    %cst_37 = arith.constant 0.000000e+00 : f32
    %76 = vector.broadcast %cst_37 : f32 to vector<8x256xf32>
    %77 = arith.select %39, %75, %76 : vector<8x256xi1>, vector<8x256xf32>
    %c56 = arith.constant 56 : index
    %c0_38 = arith.constant 0 : index
    %78 = vector.load %arg3[%c56, %c0_38] : memref<128x1xf32, #tpu.memory_space<vmem>>, vector<8x1xf32>
    %79 = vector.broadcast %78 : vector<8x1xf32> to vector<8x256xf32>
    %80 = arith.mulf %77, %79 : vector<8x256xf32>
    %81 = arith.addf %74, %80 : vector<8x256xf32>
    %c241_i32 = arith.constant 241 : i32
    %82 = tpu.dynamic_rotate %25 by %c241_i32 dim 1 : vector<8x256xf32>, i32 -> vector<8x256xf32>
    %83 = arith.andi %35, %37 : vector<8x256xi1>
    %cst_39 = arith.constant 0.000000e+00 : f32
    %84 = vector.broadcast %cst_39 : f32 to vector<8x256xf32>
    %85 = arith.select %83, %82, %84 : vector<8x256xi1>, vector<8x256xf32>
    %c64 = arith.constant 64 : index
    %c0_40 = arith.constant 0 : index
    %86 = vector.load %arg3[%c64, %c0_40] : memref<128x1xf32, #tpu.memory_space<vmem>>, vector<8x1xf32>
    %87 = vector.broadcast %86 : vector<8x1xf32> to vector<8x256xf32>
    %88 = arith.mulf %85, %87 : vector<8x256xf32>
    %89 = arith.addf %81, %88 : vector<8x256xf32>
    %c240_i32 = arith.constant 240 : i32
    %90 = tpu.dynamic_rotate %25 by %c240_i32 dim 1 : vector<8x256xf32>, i32 -> vector<8x256xf32>
    %cst_41 = arith.constant 0.000000e+00 : f32
    %91 = vector.broadcast %cst_41 : f32 to vector<8x256xf32>
    %92 = arith.select %35, %90, %91 : vector<8x256xi1>, vector<8x256xf32>
    %c72 = arith.constant 72 : index
    %c0_42 = arith.constant 0 : index
    %93 = vector.load %arg3[%c72, %c0_42] : memref<128x1xf32, #tpu.memory_space<vmem>>, vector<8x1xf32>
    %94 = vector.broadcast %93 : vector<8x1xf32> to vector<8x256xf32>
    %95 = arith.mulf %92, %94 : vector<8x256xf32>
    %96 = arith.addf %89, %95 : vector<8x256xf32>
    %c239_i32 = arith.constant 239 : i32
    %97 = tpu.dynamic_rotate %25 by %c239_i32 dim 1 : vector<8x256xf32>, i32 -> vector<8x256xf32>
    %98 = arith.andi %35, %39 : vector<8x256xi1>
    %cst_43 = arith.constant 0.000000e+00 : f32
    %99 = vector.broadcast %cst_43 : f32 to vector<8x256xf32>
    %100 = arith.select %98, %97, %99 : vector<8x256xi1>, vector<8x256xf32>
    %c80 = arith.constant 80 : index
    %c0_44 = arith.constant 0 : index
    %101 = vector.load %arg3[%c80, %c0_44] : memref<128x1xf32, #tpu.memory_space<vmem>>, vector<8x1xf32>
    %102 = vector.broadcast %101 : vector<8x1xf32> to vector<8x256xf32>
    %103 = arith.mulf %100, %102 : vector<8x256xf32>
    %104 = arith.addf %96, %103 : vector<8x256xf32>
    %105 = vector.broadcast %8 : vector<8x1xf32> to vector<8x256xf32>
    %106 = arith.addf %104, %105 : vector<8x256xf32>
    %cst_45 = arith.constant 3.000000e+00 : f32
    %107 = vector.broadcast %cst_45 : f32 to vector<8x256xf32>
    %108 = arith.addf %106, %107 : vector<8x256xf32>
    %cst_46 = arith.constant 0.000000e+00 : f32
    %cst_47 = arith.constant 6.000000e+00 : f32
    %109 = vector.broadcast %cst_46 : f32 to vector<8x256xf32>
    %110 = arith.maximumf %109, %108 : vector<8x256xf32>
    %111 = vector.broadcast %cst_47 : f32 to vector<8x256xf32>
    %112 = arith.minimumf %111, %110 : vector<8x256xf32>
    %113 = arith.mulf %106, %112 : vector<8x256xf32>
    %cst_48 = arith.constant 0.166666672 : f32
    %114 = vector.broadcast %cst_48 : f32 to vector<8x256xf32>
    %115 = arith.mulf %113, %114 : vector<8x256xf32>
    %cst_49 = arith.constant dense<0.000000e+00> : vector<8xf32>
    %116 = vector.multi_reduction <add>, %115, %cst_49 [1] : vector<8x256xf32> to vector<8xf32>
    %117 = vector.shape_cast %116 : vector<8xf32> to vector<8x1xf32>
    %cst_50 = arith.constant 3.906250e-03 : f32
    %118 = vector.broadcast %cst_50 : f32 to vector<8x1xf32>
    %119 = arith.mulf %117, %118 : vector<8x1xf32>
    %cst_51 = arith.constant dense<0.000000e+00> : vector<8x1xf32>
    %120 = tpu.matmul %3, %119, %cst_51 {dimension_numbers = #tpu.dot_dimension_numbers<[1], [0], [0], [1], [0, 0, 1, 1], [], []>} : vector<8x8xf32>, vector<8x1xf32>, vector<8x1xf32> -> vector<8x1xf32>
    %121 = arith.addf %120, %9 : vector<8x1xf32>
    %cst_52 = arith.constant 0.000000e+00 : f32
    %122 = vector.broadcast %cst_52 : f32 to vector<8x1xf32>
    %123 = arith.maximumf %121, %122 : vector<8x1xf32>
    %cst_53 = arith.constant dense<0.000000e+00> : vector<8x1xf32>
    %124 = tpu.matmul %4, %123, %cst_53 {dimension_numbers = #tpu.dot_dimension_numbers<[1], [0], [0], [1], [0, 0, 1, 1], [], []>} : vector<8x8xf32>, vector<8x1xf32>, vector<8x1xf32> -> vector<8x1xf32>
    %125 = arith.addf %124, %10 : vector<8x1xf32>
    %126 = arith.negf %125 : vector<8x1xf32>
    %127 = math.exp %126 : vector<8x1xf32>
    %cst_54 = arith.constant 1.000000e+00 : f32
    %128 = vector.broadcast %cst_54 : f32 to vector<8x1xf32>
    %129 = arith.addf %128, %127 : vector<8x1xf32>
    %130 = arith.divf %128, %129 : vector<8x1xf32>
    %cst_55 = arith.constant dense<0.000000e+00> : vector<1x256xf32>
    %131 = tpu.matmul %5, %115, %cst_55 {dimension_numbers = #tpu.dot_dimension_numbers<[1], [0], [0], [1], [0, 0, 1, 1], [], []>} : vector<1x8xf32>, vector<8x256xf32>, vector<1x256xf32> -> vector<1x256xf32>
    %132 = vector.broadcast %12 : vector<1x1xf32> to vector<1x256xf32>
    %133 = arith.addf %131, %132 : vector<1x256xf32>
    %134 = arith.negf %133 : vector<1x256xf32>
    %135 = math.exp %134 : vector<1x256xf32>
    %cst_56 = arith.constant 1.000000e+00 : f32
    %136 = vector.broadcast %cst_56 : f32 to vector<1x256xf32>
    %137 = arith.addf %136, %135 : vector<1x256xf32>
    %138 = arith.divf %136, %137 : vector<1x256xf32>
    %139 = vector.broadcast %130 : vector<8x1xf32> to vector<8x256xf32>
    %140 = vector.broadcast %138 : vector<1x256xf32> to vector<8x256xf32>
    %141 = arith.addf %139, %140 : vector<8x256xf32>
    %142 = arith.mulf %115, %141 : vector<8x256xf32>
    %cst_57 = arith.constant dense<0.000000e+00> : vector<8x256xf32>
    %143 = tpu.matmul %6, %142, %cst_57 {dimension_numbers = #tpu.dot_dimension_numbers<[1], [0], [0], [1], [0, 0, 1, 1], [], []>} : vector<8x8xf32>, vector<8x256xf32>, vector<8x256xf32> -> vector<8x256xf32>
    %144 = arith.addf %26, %143 : vector<8x256xf32>
    %145 = vector.broadcast %11 : vector<8x1xf32> to vector<8x256xf32>
    %146 = arith.addf %144, %145 : vector<8x256xf32>
    %c0_58 = arith.constant 0 : index
    %c0_59 = arith.constant 0 : index
    %c0_60 = arith.constant 0 : index
    %147 = vector.load %arg4[%c0_58, %c0_59, %c0_60] : memref<1x8x256xf32, #tpu.memory_space<vmem>>, vector<1x8x256xf32>
    %148 = vector.shape_cast %147 : vector<1x8x256xf32> to vector<8x256xf32>
    %149 = vector.shape_cast %146 : vector<8x256xf32> to vector<1x8x256xf32>
    tpu.vector_store %arg4[%c0_58, %c0_59, %c0_60], %149 {strides = array<i32>} : memref<1x8x256xf32, #tpu.memory_space<vmem>>, vector<1x8x256xf32>,
    return
  }
  func.func @transform_0(%arg0: i32) -> (i32, i32, i32) {
    %c0_i32 = arith.constant 0 : i32
    %c0_i32_0 = arith.constant 0 : i32
    %c0_i32_1 = arith.constant 0 : i32
    return %arg0, %c0_i32, %c0_i32_0 : i32, i32, i32
  }
  func.func @transform_1(%arg0: i32) -> (i32, i32) {
    %c0_i32 = arith.constant 0 : i32
    %c0_i32_0 = arith.constant 0 : i32
    %c0_i32_1 = arith.constant 0 : i32
    return %c0_i32, %c0_i32_0 : i32, i32
  }
  func.func @transform_2(%arg0: i32) -> (i32, i32) {
    %c0_i32 = arith.constant 0 : i32
    %c0_i32_0 = arith.constant 0 : i32
    %c0_i32_1 = arith.constant 0 : i32
    return %c0_i32, %c0_i32_0 : i32, i32
  }
  func.func @transform_3(%arg0: i32) -> (i32, i32, i32) {
    %c0_i32 = arith.constant 0 : i32
    %c0_i32_0 = arith.constant 0 : i32
    %c0_i32_1 = arith.constant 0 : i32
    return %arg0, %c0_i32, %c0_i32_0 : i32, i32, i32
  }
}

</mosaic_0001>

<llo_original>
// kernel: tpu_custom_call.1
$region0: #{tpu_custom_call.1}
  #allocation0 [shape = 'u32[]', space=smem, size = 0x4, offset = 0x4, fixed_abs, tag = 'smem constant byte address 0x4 - core index']
  #allocation1 [shape = 'u32[144,128]{1,0:T(1,128)}', space=vmem, size = 0x12000, scoped, tag = 'internal scratch']
  %s0 = inlined_call_operand.vmem [shape: f32[2,4,256], index: 0, kind: input, shape index: {}]
  %s1 = inlined_call_operand.vmem [shape: f32[48,8], index: 1, kind: input, shape index: {}]
  %s2 = inlined_call_operand.vmem [shape: f32[128,1], index: 2, kind: input, shape index: {}]
  %s3 = inlined_call_operand.hbm [shape: f32[2,8,256], index: 3, kind: output, shape index: {}]
  %s4 = sld [smem:[#allocation0]]
  $region45: #{tpu_custom_call.1} parent=0
    _
  %s6 = ssub.s32 1, %s4
  %s7 = scalar_select 0, %s6, %s4
  $region1: #{tpu_custom_call.1} parent=0
    #allocation2 [shape = 'u8[16384]{0}', space=vmem, size = 0x4000, scoped, tag = 'output window, operand 0']
    #allocation3 [shape = 's32[2]{0}', space=sflag, size = 0x8, scoped, tag = 'scoped memory for tpu_custom_call.1']
    %8 = vsyncpa [#allocation3], 0
    %s9 = scalar_lea.sflag [#allocation3], 1
    %10 = vsyncpa %s9, 0
    loop: start=0, step=1, limit=4
    $region2: #{tpu_custom_call.1} parent=1 // loop_pre_header
      _
    $region3: #{tpu_custom_call.1} parent=1 // loop_header
      %s12 = sphi 0, %s16
      %p13 = scmp.ge.s32.totalorder %s12, 4
      %s22 = sphi 0, %s24
      %s25 = sphi 0, %s22
      %s26 = sphi 0, %s25
      %s42 = sphi 0, %s26
      %s46 = sphi 0, %s46
      %s48 = sphi 0, %s46
      %s49 = sphi 0, %s48
      %s63 = sphi 0, %s49
      %s67 = sphi 0, %s67
      %s69 = sphi 0, %s67
      %s70 = sphi 0, %s69
      %s84 = sphi 0, %s70
      %s90 = sphi 0, %s92
      %s93 = sphi 0, %s90
      %s94 = sphi 0, %s93
      %s110 = sphi 0, %s94
    $region4: #{tpu_custom_call.1} parent=1 // loop_header_branch
      %15 = sbr.rel (%p13) target = $region8
    $region5: #{tpu_custom_call.1} parent=1 // loop_body
      %s17 = ssub.s32 %s12, 1
      %s18 = ssub.s32 %s12, 2
      %s19 = sadd.s32 %s12, 1
      %s20 = ssub.s32 %s12, %s19
      %p21 = scmp.eq.s32.totalorder %s20, 0
      %s23 = sadd.s32 %s22, 1
      %s24 = scalar_select %p21, %s22, %s23
      %p27 = pneg %p21
      %p28 = scmp.eq.s32.totalorder %s12, 1
      %p29 = por %p27, %p28
      %p30 = scmp.ne.s32.totalorder %s22, %s25
      %p31 = scmp.eq.s32.totalorder %s12, 0
      %p32 = por %p30, %p31
      %p33 = scmp.ne.s32.totalorder %s22, %s25
      %p34 = scmp.eq.s32.totalorder %s17, 1
      %p35 = por %p33, %p34
      %p36 = scmp.ne.s32.totalorder %s25, %s26
      %p37 = scmp.eq.s32.totalorder %s17, 0
      %p38 = por %p36, %p37
      %p39 = scmp.ne.s32.totalorder %s25, %s26
      %p40 = scmp.eq.s32.totalorder %s18, 1
      %p41 = por %p39, %p40
      %p43 = scmp.ne.s32.totalorder %s26, %s42
      %p44 = scmp.eq.s32.totalorder %s18, 0
      %p45 = por %p43, %p44
      %s47 = sadd.s32 %s46, 1
      %p50 = scmp.eq.s32.totalorder %s12, 1
      %p51 = scmp.ne.s32.totalorder %s46, %s48
      %p52 = scmp.eq.s32.totalorder %s12, 0
      %p53 = por %p51, %p52
      %p54 = scmp.ne.s32.totalorder %s46, %s48
      %p55 = scmp.eq.s32.totalorder %s17, 1
      %p56 = por %p54, %p55
      %p57 = scmp.ne.s32.totalorder %s48, %s49
      %p58 = scmp.eq.s32.totalorder %s17, 0
      %p59 = por %p57, %p58
      %p60 = scmp.ne.s32.totalorder %s48, %s49
      %p61 = scmp.eq.s32.totalorder %s18, 1
      %p62 = por %p60, %p61
      %p64 = scmp.ne.s32.totalorder %s49, %s63
      %p65 = scmp.eq.s32.totalorder %s18, 0
      %p66 = por %p64, %p65
      %s68 = sadd.s32 %s67, 1
      %p71 = scmp.eq.s32.totalorder %s12, 1
      %p72 = scmp.ne.s32.totalorder %s67, %s69
      %p73 = scmp.eq.s32.totalorder %s12, 0
      %p74 = por %p72, %p73
      %p75 = scmp.ne.s32.totalorder %s67, %s69
      %p76 = scmp.eq.s32.totalorder %s17, 1
      %p77 = por %p75, %p76
      %p78 = scmp.ne.s32.totalorder %s69, %s70
      %p79 = scmp.eq.s32.totalorder %s17, 0
      %p80 = por %p78, %p79
      %p81 = scmp.ne.s32.totalorder %s69, %s70
      %p82 = scmp.eq.s32.totalorder %s18, 1
      %p83 = por %p81, %p82
      %p85 = scmp.ne.s32.totalorder %s70, %s84
      %p86 = scmp.eq.s32.totalorder %s18, 0
      %p87 = por %p85, %p86
      %s88 = ssub.s32 %s12, %s19
      %p89 = scmp.eq.s32.totalorder %s88, 0
      %s91 = sadd.s32 %s90, 1
      %s92 = scalar_select %p89, %s90, %s91
      %p95 = pneg %p89
      %p96 = scmp.eq.s32.totalorder %s12, 1
      %p97 = por %p95, %p96
      %p98 = scmp.ne.s32.totalorder %s90, %s93
      %p99 = scmp.eq.s32.totalorder %s12, 0
      %p100 = por %p98, %p99
      %p101 = scmp.ne.s32.totalorder %s90, %s93
      %p102 = scmp.eq.s32.totalorder %s17, 1
      %p103 = por %p101, %p102
      %p104 = scmp.ne.s32.totalorder %s93, %s94
      %p105 = scmp.eq.s32.totalorder %s17, 0
      %p106 = por %p104, %p105
      %p107 = scmp.ne.s32.totalorder %s93, %s94
      %p108 = scmp.eq.s32.totalorder %s18, 1
      %p109 = por %p107, %p108
      %p111 = scmp.ne.s32.totalorder %s94, %s110
      %p112 = scmp.eq.s32.totalorder %s18, 0
      %p113 = por %p111, %p112
      %p114 = scmp.le.s32.totalorder 1, %s12
      %p115 = scmp.lt.s32.totalorder %s12, 3
      %p116 = pnand %p114, %p115
      %p117 = pneg %p116
      // Predicated region
      $region9: #{tpu_custom_call.1} parent=5 // pred_check
        _
      $region10: #{tpu_custom_call.1} parent=5 // pred_check_branch
        %119 = sbr.rel (%p116) target = $region12
      $region11: #{tpu_custom_call.1} parent=5 // pred_region
        %s120 = ssub.s32 %s12, 1
        // Predicated region
        $region13: #{tpu_custom_call.1} parent=11 // pred_check
          %p121 = pneg %p59
        $region14: #{tpu_custom_call.1} parent=11 // pred_check_branch
          %123 = sbr.rel (%p121) target = $region16
        $region15: #{tpu_custom_call.1} parent=11 // pred_region
          _
        $region16: #{tpu_custom_call.1} parent=11 // pred_fallthru
          _
        // Predicated region
        $region17: #{tpu_custom_call.1} parent=11 // pred_check
          %p124 = pneg %p80
        $region18: #{tpu_custom_call.1} parent=11 // pred_check_branch
          %126 = sbr.rel (%p124) target = $region20
        $region19: #{tpu_custom_call.1} parent=11 // pred_region
          _
        $region20: #{tpu_custom_call.1} parent=11 // pred_fallthru
          _
      $region12: #{tpu_custom_call.1} parent=5 // pred_fallthru
        _
      %p127 = scmp.lt.s32.totalorder %s12, 2
      // Predicated region
      $region21: #{tpu_custom_call.1} parent=5 // pred_check
        %p128 = pneg %p127
      $region22: #{tpu_custom_call.1} parent=5 // pred_check_branch
        %130 = sbr.rel (%p128) target = $region24
      $region23: #{tpu_custom_call.1} parent=5 // pred_region
        // Predicated region
        $region25: #{tpu_custom_call.1} parent=23 // pred_check
          %p131 = pneg %p32
        $region26: #{tpu_custom_call.1} parent=23 // pred_check_branch
          %133 = sbr.rel (%p131) target = $region28
        $region27: #{tpu_custom_call.1} parent=23 // pred_region
          %p134 = scmp.lt.s32.totalorder %s12, 1
          %s135 = scalar_select %p134, %s12, 1
          %s136 = smul.addr %s135, 2
          %s137 = smul.addr %s136, 4
          %s138 = scalar_lea.vmem %s0, %s137
        $region28: #{tpu_custom_call.1} parent=23 // pred_fallthru
          _
      $region24: #{tpu_custom_call.1} parent=5 // pred_fallthru
        _
      %p139 = scmp.le.s32.totalorder 1, %s12
      %p140 = scmp.lt.s32.totalorder %s12, 3
      %p141 = pnand %p139, %p140
      %p142 = pneg %p141
      // Predicated region
      $region29: #{tpu_custom_call.1} parent=5 // pred_check
        _
      $region30: #{tpu_custom_call.1} parent=5 // pred_check_branch
        %144 = sbr.rel (%p141) target = $region32
      $region31: #{tpu_custom_call.1} parent=5 // pred_region
        %s145 = ssub.s32 %s12, 1
        %p146 = scmp.lt.s32.totalorder %s17, 1
        %s147 = scalar_select %p146, %s17, 1
        %s148 = smul.addr %s147, 2
        %s149 = smul.addr %s148, 4
        %s150 = scalar_lea.vmem %s0, %s149
        %p151 = pneg %p38
        %p152 = pneg %p35
        %p153 = pneg %p59
        %p154 = pneg %p56
        %p155 = pneg %p80
        %p156 = pneg %p77
        %p157 = pneg %p106
        %p158 = pneg %p103
        %s159 = sand.u32 %s93, 1
        %s160 = scalar_lea.sflag [#allocation3], %s159
        %s161 = sand.u32 %s93, 1
        %s162 = smul.addr %s161, 16
        %s163 = scalar_lea.vmem [#allocation2], %s162
        %p164 = scmp.lt.s32.totalorder %s17, 1
        %s165 = scalar_select %p164, %s17, 1
        %s166 = smul.addr %s165, 2
        %s167 = smul.addr %s166, 4
        %s168 = scalar_lea.vmem %s0, %s167
        %v169 = vld [vmem:[%s168] sm:$0xff]
        %v170 = vld [vmem:[%s1] sm:$0xff]
        %v171 = vld [vmem:[%s1 + $0x8] sm:$0xff]
        %v172 = vld [vmem:[%s1 + $0x10] sm:$0xff]
        %v173 = vld [vmem:[%s1 + $0x18] sm:$0xff]
        %v174 = vld [vmem:[%s1 + $0x20] sm:$0x1]
        %v175 = vld [vmem:[%s1 + $0x28] sm:$0xff]
        %v176 = vld [vmem:[%s2] sm:$0xff]
        %v177 = vld [vmem:[%s2 + $0x8] sm:$0xff]
        %v178 = vld [vmem:[%s2 + $0x58] sm:$0xff]
        %v179 = vld [vmem:[%s2 + $0x60] sm:$0xff]
        %v180 = vld [vmem:[%s2 + $0x68] sm:$0xff]
        %v181 = vld [vmem:[%s2 + $0x70] sm:$0xff]
        %v182 = vld [vmem:[%s2 + $0x78] sm:$0x1]
        %184 = vset.pattern.permute.xlu0 0
        %185 = vperm.xlu0 %184, %v176
        %v186 = vpop.permute.xlu0 %185
        %189 = vset.pattern.permute.xlu0 0
        %190 = vperm.xlu0 %189, %v177
        %v191 = vpop.permute.xlu0 %190
        %v194 = vcombine.high %v169, %v169
        %vm195 = vcmask 31744
        %v197 = vsel %vm195, %v170, 0
        %v200 = vsel %vm195, %v171, 0
        %vm202 = vcmask 1043456
        %v203 = vsel %vm202, %v169, 0
        %v205 = vsel %vm202, %v194, 0
        %207 = vmatprep.subr.mxu0 0.0
        %208 = vmatpush1.msra.mxu0 0.0
        %209 = vmatprep.subr.mxu0 0.0
        %210 = vmatpush1.msra.mxu0 0.0
        %211 = vmatprep.subr.mxu0 0.0
        %212 = vmatpush1.msra.mxu0 0.0
        %213 = vmatprep.subr.mxu0 0.0
        %214 = vmatpush1.msra.mxu0 0.0
        %215 = vmatprep.subr.mxu0 0.0
        %216 = vmatpush1.msra.mxu0 0.0
        %217 = vmatprep.subr.mxu0 0.0
        %218 = vmatpush1.msra.mxu0 0.0
        %219 = vmatprep.subr.mxu0 0.0
        %220 = vmatpush1.msra.mxu0 0.0
        %221 = vmatprep.subr.mxu0 0.0
        %222 = vmatpush1.msra.mxu0 0.0
        %223 = vmatprep.subr.mxu0 0.0
        %224 = vmatpush1.msra.mxu0 0.0
        %225 = vmatprep.subr.mxu0 0.0
        %226 = vmatpush1.msra.mxu0 0.0
        %227 = vmatprep.subr.mxu0 0.0
        %228 = vmatpush1.msra.mxu0 0.0
        %229 = vmatprep.subr.mxu0 0.0
        %230 = vmatpush1.msra.mxu0 0.0
        %231 = vmatprep.subr.mxu0 0.0
        %232 = vmatpush1.msra.mxu0 0.0
        %233 = vmatprep.subr.mxu0 0.0
        %234 = vmatpush1.msra.mxu0 0.0
        %235 = vmatprep.subr.mxu0 0.0
        %236 = vmatpush1.msra.mxu0 0.0
        %237 = vmatprep.subr.mxu0 %v205
        %238 = vmatpush1.msra.mxu0 %v203
        %239 = vmatprep.subr.mxu0 0.0
        %240 = vmatpush2.msra.mxu0 0.0
        %241 = vmatprep.subr.mxu0 0.0
        %242 = vmatpush2.msra.mxu0 0.0
        %243 = vmatprep.subr.mxu0 0.0
        %244 = vmatpush2.msra.mxu0 0.0
        %245 = vmatprep.subr.mxu0 0.0
        %246 = vmatpush2.msra.mxu0 0.0
        %247 = vmatprep.subr.mxu0 0.0
        %248 = vmatpush2.msra.mxu0 0.0
        %249 = vmatprep.subr.mxu0 0.0
        %250 = vmatpush2.msra.mxu0 0.0
        %251 = vmatprep.subr.mxu0 0.0
        %252 = vmatpush2.msra.mxu0 0.0
        %253 = vmatprep.subr.mxu0 0.0
        %254 = vmatpush2.msra.mxu0 0.0
        %255 = vmatprep.subr.mxu0 0.0
        %256 = vmatpush2.msra.mxu0 0.0
        %257 = vmatprep.subr.mxu0 0.0
        %258 = vmatpush2.msra.mxu0 0.0
        %259 = vmatprep.subr.mxu0 0.0
        %260 = vmatpush2.msra.mxu0 0.0
        %261 = vmatprep.subr.mxu0 0.0
        %262 = vmatpush2.msra.mxu0 0.0
        %263 = vmatprep.subr.mxu0 0.0
        %264 = vmatpush2.msra.mxu0 0.0
        %265 = vmatprep.subr.mxu0 0.0
        %266 = vmatpush2.msra.mxu0 0.0
        %267 = vmatprep.subr.mxu0 0.0
        %268 = vmatpush2.msra.mxu0 0.0
        %269 = vmatprep.subr.mxu0 0.0
        %270 = vmatpush2.msra.mxu0 0.0
        %271 = vmatprep.mubr.f32.mxu0 0.0
        %272 = vmatmul.mubr.f32.gmra.mxu0 %v197
        %v273 = vpop.f32.mrf.mxu0
        %v274 = vadd.f32 %v186, %v273
        %v275 = vpop.f32.mrf.mxu0
        %v276 = vadd.f32 %v186, %v275
        %277 = vmatprep.mubr.f32.mxu0 0.0
        %278 = vmatmul.mubr.f32.gmra.mxu0 %v200
        %v279 = vpop.f32.mrf.mxu0
        %v280 = vadd.f32 %v191, %v279
        %v281 = vpop.f32.mrf.mxu0
        %v282 = vadd.f32 %v191, %v281
        %283 = vdwg.mxu0
        %v284 = vadd.f32 %v274, 3.0
        %v285 = vadd.f32 %v276, 3.0
        %v286 = vmax.f32 %v284, 0.0
        %v287 = vmax.f32 %v285, 0.0
        %v288 = vmin.f32 %v286, 6.0
        %v289 = vmin.f32 %v287, 6.0
        %v290 = vmul.f32 %v274, %v288
        %v291 = vmul.f32 %v276, %v289
        %v292 = vmul.f32 %v290, 0.16666667
        %v293 = vmul.f32 %v291, 0.16666667
        %v294 = vlaneseq
        %v295 = vand.u32 %v294, 127
        %v296 = vadd.s32 %v295, 128
        %v297 = vand.u32 %v295, 15
        %v298 = vand.u32 %v296, 15
        %v299 = vshra.s32 %v295, 4
        %v300 = vshra.s32 %v296, 4
        %vm301 = vcmp.ge.s32.totalorder %v299, 1
        %vm302 = vcmp.ge.s32.totalorder %v300, 1
        %vm303 = vcmp.le.s32.totalorder %v299, 14
        %vm304 = vcmp.le.s32.totalorder %v300, 14
        %vm305 = vcmp.ge.s32.totalorder %v297, 1
        %vm306 = vcmp.ge.s32.totalorder %v298, 1
        %vm307 = vcmp.le.s32.totalorder %v297, 14
        %vm308 = vcmp.le.s32.totalorder %v298, 14
        %309 = vrot.lane.b32.xlu0 %v292, 17
        %v310 = vpop.permute.xlu0 %309
        %311 = vrot.lane.b32.xlu0 %v293, 17
        %v312 = vpop.permute.xlu0 %311
        %vm313 = vcmp.lt.s32.totalorder %v295, 17
        %v314 = vsel %vm313, %v310, %v312
        %v315 = vsel %vm313, %v312, %v310
        %vm316 = vmand %vm301, %vm305
        %vm317 = vmand %vm302, %vm306
        %v318 = vsel %vm316, %v315, 0.0
        %v319 = vsel %vm317, %v314, 0.0
        %v320 = vld [vmem:[%s2 + $0x10] sm:$0xff]
        %322 = vset.pattern.permute.xlu0 0
        %323 = vperm.xlu0 %322, %v320
        %v324 = vpop.permute.xlu0 %323
        %v326 = vmul.f32 %v318, %v324
        %v327 = vmul.f32 %v319, %v324
        %v328 = vadd.f32 %v326, 0.0
        %v329 = vadd.f32 %v327, 0.0
        %330 = vrot.lane.b32.xlu0 %v292, 16
        %v331 = vpop.permute.xlu0 %330
        %332 = vrot.lane.b32.xlu0 %v293, 16
        %v333 = vpop.permute.xlu0 %332
        %vm334 = vcmp.lt.s32.totalorder %v295, 16
        %v335 = vsel %vm334, %v331, %v333
        %v336 = vsel %vm334, %v333, %v331
        %v337 = vsel %vm301, %v336, 0.0
        %v338 = vsel %vm302, %v335, 0.0
        %v339 = vld [vmem:[%s2 + $0x18] sm:$0xff]
        %341 = vset.pattern.permute.xlu0 0
        %342 = vperm.xlu0 %341, %v339
        %v343 = vpop.permute.xlu0 %342
        %v345 = vmul.f32 %v337, %v343
        %v346 = vmul.f32 %v338, %v343
        %v347 = vadd.f32 %v328, %v345
        %v348 = vadd.f32 %v329, %v346
        %349 = vrot.lane.b32.xlu0 %v292, 15
        %v350 = vpop.permute.xlu0 %349
        %351 = vrot.lane.b32.xlu0 %v293, 15
        %v352 = vpop.permute.xlu0 %351
        %vm353 = vcmp.lt.s32.totalorder %v295, 15
        %v354 = vsel %vm353, %v350, %v352
        %v355 = vsel %vm353, %v352, %v350
        %vm356 = vmand %vm301, %vm307
        %vm357 = vmand %vm302, %vm308
        %v358 = vsel %vm356, %v355, 0.0
        %v359 = vsel %vm357, %v354, 0.0
        %v360 = vld [vmem:[%s2 + $0x20] sm:$0xff]
        %362 = vset.pattern.permute.xlu0 0
        %363 = vperm.xlu0 %362, %v360
        %v364 = vpop.permute.xlu0 %363
        %v366 = vmul.f32 %v358, %v364
        %v367 = vmul.f32 %v359, %v364
        %v368 = vadd.f32 %v347, %v366
        %v369 = vadd.f32 %v348, %v367
        %370 = vrot.lane.b32.xlu0 %v292, 1
        %v371 = vpop.permute.xlu0 %370
        %372 = vrot.lane.b32.xlu0 %v293, 1
        %v373 = vpop.permute.xlu0 %372
        %vm374 = vcmp.lt.s32.totalorder %v295, 1
        %v375 = vsel %vm374, %v371, %v373
        %v376 = vsel %vm374, %v373, %v371
        %v377 = vsel %vm305, %v376, 0.0
        %v378 = vsel %vm306, %v375, 0.0
        %v379 = vld [vmem:[%s2 + $0x28] sm:$0xff]
        %381 = vset.pattern.permute.xlu0 0
        %382 = vperm.xlu0 %381, %v379
        %v383 = vpop.permute.xlu0 %382
        %v385 = vmul.f32 %v377, %v383
        %v386 = vmul.f32 %v378, %v383
        %v387 = vadd.f32 %v368, %v385
        %v388 = vadd.f32 %v369, %v386
        %v389 = vld [vmem:[%s2 + $0x30] sm:$0xff]
        %391 = vset.pattern.permute.xlu0 0
        %392 = vperm.xlu0 %391, %v389
        %v393 = vpop.permute.xlu0 %392
        %v395 = vmul.f32 %v292, %v393
        %v396 = vmul.f32 %v293, %v393
        %v397 = vadd.f32 %v387, %v395
        %v398 = vadd.f32 %v388, %v396
        %399 = vrot.lane.b32.xlu0 %v292, 127
        %v400 = vpop.permute.xlu0 %399
        %401 = vrot.lane.b32.xlu0 %v293, 127
        %v402 = vpop.permute.xlu0 %401
        %vm403 = vcmp.lt.s32.totalorder %v295, 127
        %v404 = vsel %vm403, %v400, %v402
        %v405 = vsel %vm403, %v402, %v400
        %v406 = vsel %vm307, %v404, 0.0
        %v407 = vsel %vm308, %v405, 0.0
        %v408 = vld [vmem:[%s2 + $0x38] sm:$0xff]
        %410 = vset.pattern.permute.xlu0 0
        %411 = vperm.xlu0 %410, %v408
        %v412 = vpop.permute.xlu0 %411
        %v414 = vmul.f32 %v406, %v412
        %v415 = vmul.f32 %v407, %v412
        %v416 = vadd.f32 %v397, %v414
        %v417 = vadd.f32 %v398, %v415
        %418 = vrot.lane.b32.xlu0 %v292, 113
        %v419 = vpop.permute.xlu0 %418
        %420 = vrot.lane.b32.xlu0 %v293, 113
        %v421 = vpop.permute.xlu0 %420
        %vm422 = vcmp.lt.s32.totalorder %v295, 113
        %v423 = vsel %vm422, %v419, %v421
        %v424 = vsel %vm422, %v421, %v419
        %vm425 = vmand %vm303, %vm305
        %vm426 = vmand %vm304, %vm306
        %v427 = vsel %vm425, %v423, 0.0
        %v428 = vsel %vm426, %v424, 0.0
        %v429 = vld [vmem:[%s2 + $0x40] sm:$0xff]
        %431 = vset.pattern.permute.xlu0 0
        %432 = vperm.xlu0 %431, %v429
        %v433 = vpop.permute.xlu0 %432
        %v435 = vmul.f32 %v427, %v433
        %v436 = vmul.f32 %v428, %v433
        %v437 = vadd.f32 %v416, %v435
        %v438 = vadd.f32 %v417, %v436
        %439 = vrot.lane.b32.xlu0 %v292, 112
        %v440 = vpop.permute.xlu0 %439
        %441 = vrot.lane.b32.xlu0 %v293, 112
        %v442 = vpop.permute.xlu0 %441
        %vm443 = vcmp.lt.s32.totalorder %v295, 112
        %v444 = vsel %vm443, %v440, %v442
        %v445 = vsel %vm443, %v442, %v440
        %v446 = vsel %vm303, %v444, 0.0
        %v447 = vsel %vm304, %v445, 0.0
        %v448 = vld [vmem:[%s2 + $0x48] sm:$0xff]
        %450 = vset.pattern.permute.xlu0 0
        %451 = vperm.xlu0 %450, %v448
        %v452 = vpop.permute.xlu0 %451
        %v454 = vmul.f32 %v446, %v452
        %v455 = vmul.f32 %v447, %v452
        %v456 = vadd.f32 %v437, %v454
        %v457 = vadd.f32 %v438, %v455
        %458 = vrot.lane.b32.xlu0 %v292, 111
        %v459 = vpop.permute.xlu0 %458
        %460 = vrot.lane.b32.xlu0 %v293, 111
        %v461 = vpop.permute.xlu0 %460
        %vm462 = vcmp.lt.s32.totalorder %v295, 111
        %v463 = vsel %vm462, %v459, %v461
        %v464 = vsel %vm462, %v461, %v459
        %vm465 = vmand %vm303, %vm307
        %vm466 = vmand %vm304, %vm308
        %v467 = vsel %vm465, %v463, 0.0
        %v468 = vsel %vm466, %v464, 0.0
        %v469 = vld [vmem:[%s2 + $0x50] sm:$0xff]
        %471 = vset.pattern.permute.xlu0 0
        %472 = vperm.xlu0 %471, %v469
        %v473 = vpop.permute.xlu0 %472
        %v475 = vmul.f32 %v467, %v473
        %v476 = vmul.f32 %v468, %v473
        %v477 = vadd.f32 %v456, %v475
        %v478 = vadd.f32 %v457, %v476
        %480 = vset.pattern.permute.xlu0 0
        %481 = vperm.xlu0 %480, %v178
        %v482 = vpop.permute.xlu0 %481
        %v484 = vadd.f32 %v477, %v482
        %v485 = vadd.f32 %v478, %v482
        %v486 = vadd.f32 %v484, 3.0
        %v487 = vadd.f32 %v485, 3.0
        %v488 = vmax.f32 %v486, 0.0
        %v489 = vmax.f32 %v487, 0.0
        %v490 = vmin.f32 %v488, 6.0
        %v491 = vmin.f32 %v489, 6.0
        %v492 = vmul.f32 %v484, %v490
        %v493 = vmul.f32 %v485, %v491
        %v494 = vmul.f32 %v492, 0.16666667
        %v495 = vmul.f32 %v493, 0.16666667
        %v496 = vadd.f32 %v494, %v495
        %497 = vadd.xlane.f32.xlu0 %v496
        %v498 = vpop.xlane.xlu0 %497
        %v499 = vmul.f32 %v498, 0.00390625
        %vm500 = vcmask 64512
        %v502 = vsel %vm500, %v172, 0
        %504 = vmatprep.subr.mxu0 0.0
        %505 = vmatpush1.msra.mxu0 0.0
        %506 = vmatprep.subr.mxu0 0.0
        %507 = vmatpush1.msra.mxu0 0.0
        %508 = vmatprep.subr.mxu0 0.0
        %509 = vmatpush1.msra.mxu0 0.0
        %510 = vmatprep.subr.mxu0 0.0
        %511 = vmatpush1.msra.mxu0 0.0
        %512 = vmatprep.subr.mxu0 0.0
        %513 = vmatpush1.msra.mxu0 0.0
        %514 = vmatprep.subr.mxu0 0.0
        %515 = vmatpush1.msra.mxu0 0.0
        %516 = vmatprep.subr.mxu0 0.0
        %517 = vmatpush1.msra.mxu0 0.0
        %518 = vmatprep.subr.mxu0 0.0
        %519 = vmatpush1.msra.mxu0 0.0
        %520 = vmatprep.subr.mxu0 0.0
        %521 = vmatpush1.msra.mxu0 0.0
        %522 = vmatprep.subr.mxu0 0.0
        %523 = vmatpush1.msra.mxu0 0.0
        %524 = vmatprep.subr.mxu0 0.0
        %525 = vmatpush1.msra.mxu0 0.0
        %526 = vmatprep.subr.mxu0 0.0
        %527 = vmatpush1.msra.mxu0 0.0
        %528 = vmatprep.subr.mxu0 0.0
        %529 = vmatpush1.msra.mxu0 0.0
        %530 = vmatprep.subr.mxu0 0.0
        %531 = vmatpush1.msra.mxu0 0.0
        %532 = vmatprep.subr.mxu0 0.0
        %533 = vmatpush1.msra.mxu0 0.0
        %534 = vmatprep.subr.mxu0 0.0
        %535 = vmatpush1.msra.mxu0 %v499
        %536 = vmatprep.subr.mxu0 0.0
        %537 = vmatpush2.msra.mxu0 0.0
        %538 = vmatprep.subr.mxu0 0.0
        %539 = vmatpush2.msra.mxu0 0.0
        %540 = vmatprep.subr.mxu0 0.0
        %541 = vmatpush2.msra.mxu0 0.0
        %542 = vmatprep.subr.mxu0 0.0
        %543 = vmatpush2.msra.mxu0 0.0
        %544 = vmatprep.subr.mxu0 0.0
        %545 = vmatpush2.msra.mxu0 0.0
        %546 = vmatprep.subr.mxu0 0.0
        %547 = vmatpush2.msra.mxu0 0.0
        %548 = vmatprep.subr.mxu0 0.0
        %549 = vmatpush2.msra.mxu0 0.0
        %550 = vmatprep.subr.mxu0 0.0
        %551 = vmatpush2.msra.mxu0 0.0
        %552 = vmatprep.subr.mxu0 0.0
        %553 = vmatpush2.msra.mxu0 0.0
        %554 = vmatprep.subr.mxu0 0.0
        %555 = vmatpush2.msra.mxu0 0.0
        %556 = vmatprep.subr.mxu0 0.0
        %557 = vmatpush2.msra.mxu0 0.0
        %558 = vmatprep.subr.mxu0 0.0
        %559 = vmatpush2.msra.mxu0 0.0
        %560 = vmatprep.subr.mxu0 0.0
        %561 = vmatpush2.msra.mxu0 0.0
        %562 = vmatprep.subr.mxu0 0.0
        %563 = vmatpush2.msra.mxu0 0.0
        %564 = vmatprep.subr.mxu0 0.0
        %565 = vmatpush2.msra.mxu0 0.0
        %566 = vmatprep.subr.mxu0 0.0
        %567 = vmatpush2.msra.mxu0 0.0
        %568 = vmatprep.mubr.f32.mxu0 0.0
        %569 = vmatmul.mubr.f32.gmra.mxu0 %v502
        %v570 = vpop.f32.mrf.mxu0
        %v571 = vadd.f32 %v179, %v570
        %v572 = vpop.f32.mrf.mxu0
        %573 = vdwg.mxu0
        %v574 = vmax.f32 %v571, 0.0
        %v576 = vsel %vm500, %v173, 0
        %578 = vmatprep.subr.mxu0 0.0
        %579 = vmatpush1.msra.mxu0 0.0
        %580 = vmatprep.subr.mxu0 0.0
        %581 = vmatpush1.msra.mxu0 0.0
        %582 = vmatprep.subr.mxu0 0.0
        %583 = vmatpush1.msra.mxu0 0.0
        %584 = vmatprep.subr.mxu0 0.0
        %585 = vmatpush1.msra.mxu0 0.0
        %586 = vmatprep.subr.mxu0 0.0
        %587 = vmatpush1.msra.mxu0 0.0
        %588 = vmatprep.subr.mxu0 0.0
        %589 = vmatpush1.msra.mxu0 0.0
        %590 = vmatprep.subr.mxu0 0.0
        %591 = vmatpush1.msra.mxu0 0.0
        %592 = vmatprep.subr.mxu0 0.0
        %593 = vmatpush1.msra.mxu0 0.0
        %594 = vmatprep.subr.mxu0 0.0
        %595 = vmatpush1.msra.mxu0 0.0
        %596 = vmatprep.subr.mxu0 0.0
        %597 = vmatpush1.msra.mxu0 0.0
        %598 = vmatprep.subr.mxu0 0.0
        %599 = vmatpush1.msra.mxu0 0.0
        %600 = vmatprep.subr.mxu0 0.0
        %601 = vmatpush1.msra.mxu0 0.0
        %602 = vmatprep.subr.mxu0 0.0
        %603 = vmatpush1.msra.mxu0 0.0
        %604 = vmatprep.subr.mxu0 0.0
        %605 = vmatpush1.msra.mxu0 0.0
        %606 = vmatprep.subr.mxu0 0.0
        %607 = vmatpush1.msra.mxu0 0.0
        %608 = vmatprep.subr.mxu0 0.0
        %609 = vmatpush1.msra.mxu0 %v574
        %610 = vmatprep.subr.mxu0 0.0
        %611 = vmatpush2.msra.mxu0 0.0
        %612 = vmatprep.subr.mxu0 0.0
        %613 = vmatpush2.msra.mxu0 0.0
        %614 = vmatprep.subr.mxu0 0.0
        %615 = vmatpush2.msra.mxu0 0.0
        %616 = vmatprep.subr.mxu0 0.0
        %617 = vmatpush2.msra.mxu0 0.0
        %618 = vmatprep.subr.mxu0 0.0
        %619 = vmatpush2.msra.mxu0 0.0
        %620 = vmatprep.subr.mxu0 0.0
        %621 = vmatpush2.msra.mxu0 0.0
        %622 = vmatprep.subr.mxu0 0.0
        %623 = vmatpush2.msra.mxu0 0.0
        %624 = vmatprep.subr.mxu0 0.0
        %625 = vmatpush2.msra.mxu0 0.0
        %626 = vmatprep.subr.mxu0 0.0
        %627 = vmatpush2.msra.mxu0 0.0
        %628 = vmatprep.subr.mxu0 0.0
        %629 = vmatpush2.msra.mxu0 0.0
        %630 = vmatprep.subr.mxu0 0.0
        %631 = vmatpush2.msra.mxu0 0.0
        %632 = vmatprep.subr.mxu0 0.0
        %633 = vmatpush2.msra.mxu0 0.0
        %634 = vmatprep.subr.mxu0 0.0
        %635 = vmatpush2.msra.mxu0 0.0
        %636 = vmatprep.subr.mxu0 0.0
        %637 = vmatpush2.msra.mxu0 0.0
        %638 = vmatprep.subr.mxu0 0.0
        %639 = vmatpush2.msra.mxu0 0.0
        %640 = vmatprep.subr.mxu0 0.0
        %641 = vmatpush2.msra.mxu0 0.0
        %642 = vmatprep.mubr.f32.mxu0 0.0
        %643 = vmatmul.mubr.f32.gmra.mxu0 %v576
        %v644 = vpop.f32.mrf.mxu0
        %v645 = vadd.f32 %v180, %v644
        %v646 = vpop.f32.mrf.mxu0
        %647 = vdwg.mxu0
        %v648 = vxor.u32 %v645, 2147483648
        %v649 = vmul.f32 %v648, 1.442695
        %v650 = vpow.pop %v649
        %v651 = vadd.f32 %v650, 1.0
        %v652 = vrcp.pop %v651
        %v653 = vmul.f32 1.0, %v652
        %655 = vset.pattern.permute.xlu0 0
        %656 = vperm.xlu0 %655, %v182
        %v657 = vpop.permute.xlu0 %656
        %v660 = vsel %vm500, %v174, 0
        %662 = vmatprep.subr.mxu0 0.0
        %663 = vmatpush1.msra.mxu0 0.0
        %664 = vmatprep.subr.mxu0 0.0
        %665 = vmatpush1.msra.mxu0 0.0
        %666 = vmatprep.subr.mxu0 0.0
        %667 = vmatpush1.msra.mxu0 0.0
        %668 = vmatprep.subr.mxu0 0.0
        %669 = vmatpush1.msra.mxu0 0.0
        %670 = vmatprep.subr.mxu0 0.0
        %671 = vmatpush1.msra.mxu0 0.0
        %672 = vmatprep.subr.mxu0 0.0
        %673 = vmatpush1.msra.mxu0 0.0
        %674 = vmatprep.subr.mxu0 0.0
        %675 = vmatpush1.msra.mxu0 0.0
        %676 = vmatprep.subr.mxu0 0.0
        %677 = vmatpush1.msra.mxu0 0.0
        %678 = vmatprep.subr.mxu0 0.0
        %679 = vmatpush1.msra.mxu0 0.0
        %680 = vmatprep.subr.mxu0 0.0
        %681 = vmatpush1.msra.mxu0 0.0
        %682 = vmatprep.subr.mxu0 0.0
        %683 = vmatpush1.msra.mxu0 0.0
        %684 = vmatprep.subr.mxu0 0.0
        %685 = vmatpush1.msra.mxu0 0.0
        %686 = vmatprep.subr.mxu0 0.0
        %687 = vmatpush1.msra.mxu0 0.0
        %688 = vmatprep.subr.mxu0 0.0
        %689 = vmatpush1.msra.mxu0 0.0
        %690 = vmatprep.subr.mxu0 0.0
        %691 = vmatpush1.msra.mxu0 0.0
        %692 = vmatprep.subr.mxu0 %v495
        %693 = vmatpush1.msra.mxu0 %v494
        %694 = vmatprep.subr.mxu0 0.0
        %695 = vmatpush2.msra.mxu0 0.0
        %696 = vmatprep.subr.mxu0 0.0
        %697 = vmatpush2.msra.mxu0 0.0
        %698 = vmatprep.subr.mxu0 0.0
        %699 = vmatpush2.msra.mxu0 0.0
        %700 = vmatprep.subr.mxu0 0.0
        %701 = vmatpush2.msra.mxu0 0.0
        %702 = vmatprep.subr.mxu0 0.0
        %703 = vmatpush2.msra.mxu0 0.0
        %704 = vmatprep.subr.mxu0 0.0
        %705 = vmatpush2.msra.mxu0 0.0
        %706 = vmatprep.subr.mxu0 0.0
        %707 = vmatpush2.msra.mxu0 0.0
        %708 = vmatprep.subr.mxu0 0.0
        %709 = vmatpush2.msra.mxu0 0.0
        %710 = vmatprep.subr.mxu0 0.0
        %711 = vmatpush2.msra.mxu0 0.0
        %712 = vmatprep.subr.mxu0 0.0
        %713 = vmatpush2.msra.mxu0 0.0
        %714 = vmatprep.subr.mxu0 0.0
        %715 = vmatpush2.msra.mxu0 0.0
        %716 = vmatprep.subr.mxu0 0.0
        %717 = vmatpush2.msra.mxu0 0.0
        %718 = vmatprep.subr.mxu0 0.0
        %719 = vmatpush2.msra.mxu0 0.0
        %720 = vmatprep.subr.mxu0 0.0
        %721 = vmatpush2.msra.mxu0 0.0
        %722 = vmatprep.subr.mxu0 0.0
        %723 = vmatpush2.msra.mxu0 0.0
        %724 = vmatprep.subr.mxu0 0.0
        %725 = vmatpush2.msra.mxu0 0.0
        %726 = vmatprep.mubr.f32.mxu0 0.0
        %727 = vmatmul.mubr.f32.gmra.mxu0 %v660
        %v728 = vpop.f32.mrf.mxu0
        %v729 = vadd.f32 %v657, %v728
        %v730 = vpop.f32.mrf.mxu0
        %v731 = vadd.f32 %v657, %v730
        %732 = vdwg.mxu0
        %v733 = vxor.u32 %v729, 2147483648
        %v734 = vxor.u32 %v731, 2147483648
        %v735 = vmul.f32 %v733, 1.442695
        %v736 = vpow.pop %v735
        %v737 = vmul.f32 %v734, 1.442695
        %v738 = vpow.pop %v737
        %v739 = vadd.f32 %v736, 1.0
        %v740 = vadd.f32 %v738, 1.0
        %v741 = vrcp.pop %v739
        %v742 = vmul.f32 1.0, %v741
        %v743 = vrcp.pop %v740
        %v744 = vmul.f32 1.0, %v743
        %746 = vset.pattern.permute.xlu0 0
        %747 = vperm.xlu0 %746, %v653
        %v748 = vpop.permute.xlu0 %747
        %v750 = vlaneseq
        %v751 = vshrl.u32 %v750, 7
        %v752 = vsub.s32 0, %v751
        %v753 = vrot.slane %v742, %v752
        %v754 = vlaneseq
        %v755 = vshrl.u32 %v754, 7
        %v756 = vsub.s32 0, %v755
        %v757 = vrot.slane %v744, %v756
        %v758 = vadd.f32 %v748, %v753
        %v759 = vadd.f32 %v748, %v757
        %v760 = vmul.f32 %v494, %v758
        %v761 = vmul.f32 %v495, %v759
        %v763 = vsel %vm500, %v175, 0
        %765 = vmatprep.subr.mxu0 0.0
        %766 = vmatpush1.msra.mxu0 0.0
        %767 = vmatprep.subr.mxu0 0.0
        %768 = vmatpush1.msra.mxu0 0.0
        %769 = vmatprep.subr.mxu0 0.0
        %770 = vmatpush1.msra.mxu0 0.0
        %771 = vmatprep.subr.mxu0 0.0
        %772 = vmatpush1.msra.mxu0 0.0
        %773 = vmatprep.subr.mxu0 0.0
        %774 = vmatpush1.msra.mxu0 0.0
        %775 = vmatprep.subr.mxu0 0.0
        %776 = vmatpush1.msra.mxu0 0.0
        %777 = vmatprep.subr.mxu0 0.0
        %778 = vmatpush1.msra.mxu0 0.0
        %779 = vmatprep.subr.mxu0 0.0
        %780 = vmatpush1.msra.mxu0 0.0
        %781 = vmatprep.subr.mxu0 0.0
        %782 = vmatpush1.msra.mxu0 0.0
        %783 = vmatprep.subr.mxu0 0.0
        %784 = vmatpush1.msra.mxu0 0.0
        %785 = vmatprep.subr.mxu0 0.0
        %786 = vmatpush1.msra.mxu0 0.0
        %787 = vmatprep.subr.mxu0 0.0
        %788 = vmatpush1.msra.mxu0 0.0
        %789 = vmatprep.subr.mxu0 0.0
        %790 = vmatpush1.msra.mxu0 0.0
        %791 = vmatprep.subr.mxu0 0.0
        %792 = vmatpush1.msra.mxu0 0.0
        %793 = vmatprep.subr.mxu0 0.0
        %794 = vmatpush1.msra.mxu0 0.0
        %795 = vmatprep.subr.mxu0 %v761
        %796 = vmatpush1.msra.mxu0 %v760
        %797 = vmatprep.subr.mxu0 0.0
        %798 = vmatpush2.msra.mxu0 0.0
        %799 = vmatprep.subr.mxu0 0.0
        %800 = vmatpush2.msra.mxu0 0.0
        %801 = vmatprep.subr.mxu0 0.0
        %802 = vmatpush2.msra.mxu0 0.0
        %803 = vmatprep.subr.mxu0 0.0
        %804 = vmatpush2.msra.mxu0 0.0
        %805 = vmatprep.subr.mxu0 0.0
        %806 = vmatpush2.msra.mxu0 0.0
        %807 = vmatprep.subr.mxu0 0.0
        %808 = vmatpush2.msra.mxu0 0.0
        %809 = vmatprep.subr.mxu0 0.0
        %810 = vmatpush2.msra.mxu0 0.0
        %811 = vmatprep.subr.mxu0 0.0
        %812 = vmatpush2.msra.mxu0 0.0
        %813 = vmatprep.subr.mxu0 0.0
        %814 = vmatpush2.msra.mxu0 0.0
        %815 = vmatprep.subr.mxu0 0.0
        %816 = vmatpush2.msra.mxu0 0.0
        %817 = vmatprep.subr.mxu0 0.0
        %818 = vmatpush2.msra.mxu0 0.0
        %819 = vmatprep.subr.mxu0 0.0
        %820 = vmatpush2.msra.mxu0 0.0
        %821 = vmatprep.subr.mxu0 0.0
        %822 = vmatpush2.msra.mxu0 0.0
        %823 = vmatprep.subr.mxu0 0.0
        %824 = vmatpush2.msra.mxu0 0.0
        %825 = vmatprep.subr.mxu0 0.0
        %826 = vmatpush2.msra.mxu0 0.0
        %827 = vmatprep.subr.mxu0 0.0
        %828 = vmatpush2.msra.mxu0 0.0
        %829 = vmatprep.mubr.f32.mxu0 0.0
        %830 = vmatmul.mubr.f32.gmra.mxu0 %v763
        %v831 = vpop.f32.mrf.mxu0
        %v832 = vadd.f32 0.0, %v831
        %v833 = vpop.f32.mrf.mxu0
        %v834 = vadd.f32 0.0, %v833
        %835 = vdwg.mxu0
        %v836 = vadd.f32 %v280, %v832
        %v837 = vadd.f32 %v282, %v834
        %839 = vset.pattern.permute.xlu0 0
        %840 = vperm.xlu0 %839, %v181
        %v841 = vpop.permute.xlu0 %840
        %v843 = vadd.f32 %v836, %v841
        %v844 = vadd.f32 %v837, %v841
        %845 = vst [vmem:[%s163] sm:$0xff] %v843
        %846 = vst [vmem:[%s163 + $0x8] sm:$0xff] %v844
        %s847 = sand.u32 %s93, 1
        %s848 = scalar_lea.sflag [#allocation3], %s847
        %s849 = sand.u32 %s93, 1
        %s850 = smul.addr %s849, 16
        %s851 = scalar_lea.vmem [#allocation2], %s850
        // Predicated region
        $region33: #{tpu_custom_call.1} parent=31 // pred_check
          %p852 = pneg %p103
        $region34: #{tpu_custom_call.1} parent=31 // pred_check_branch
          %854 = sbr.rel (%p852) target = $region36
        $region35: #{tpu_custom_call.1} parent=31 // pred_region
          %s856 = ssub.s32 256, 256
          %857 = vsyncadd %s848, %s856
          %s858 = smul.addr %s17, 2
          %s859 = smul.addr %s858, 128
          %s860 = scalar_lea.hbm %s3, %s859
          %s862 = sshll.u32 %s851, 4
          %s863 = int_to_ptr.vmem [resolvable:$true] %s862
          %865 = dma.vmem_to_hbm [thread:$0]  %s863, 256, %s860, %s848
        $region36: #{tpu_custom_call.1} parent=31 // pred_fallthru
          _
      $region32: #{tpu_custom_call.1} parent=5 // pred_fallthru
        _
      %p866 = scmp.le.s32.totalorder 2, %s12
      // Predicated region
      $region37: #{tpu_custom_call.1} parent=5 // pred_check
        %p867 = pneg %p866
      $region38: #{tpu_custom_call.1} parent=5 // pred_check_branch
        %869 = sbr.rel (%p867) target = $region40
      $region39: #{tpu_custom_call.1} parent=5 // pred_region
        %s870 = ssub.s32 %s12, 2
        // Predicated region
        $region41: #{tpu_custom_call.1} parent=39 // pred_check
          %p871 = pneg %p109
        $region42: #{tpu_custom_call.1} parent=39 // pred_check_branch
          %873 = sbr.rel (%p871) target = $region44
        $region43: #{tpu_custom_call.1} parent=39 // pred_region
          %s874 = sand.u32 %s94, 1
          %s875 = scalar_lea.sflag [#allocation3], %s874
          %s876 = sand.u32 %s94, 1
          %s877 = smul.addr %s876, 16
          %s878 = scalar_lea.vmem [#allocation2], %s877
          %879 = dma.done %s875, 256
        $region44: #{tpu_custom_call.1} parent=39 // pred_fallthru
          _
      $region40: #{tpu_custom_call.1} parent=5 // pred_fallthru
        _
    $region6: #{tpu_custom_call.1} parent=1 // loop_footer
      %s16 = sadd.s32 1, %s12
    $region7: #{tpu_custom_call.1} parent=1 // loop_footer_branch
      %11 = sbr.rel target = $region3
    $region8: #{tpu_custom_call.1} parent=1 // loop_exit
      _
    %880 = vsyncpa [#allocation3], 1
    %s881 = scalar_lea.sflag [#allocation3], 1
    %882 = vsyncpa %s881, 1

</llo_original>
